<compile_context>
chip_gen: v7x
topology: tpu7x:2x2x1
jax: 0.10.0
libtpu: 0.0.40
codegen_flags: <defaults>
</compile_context>

<pallas_src>
import math
import functools

import jax
import jax.numpy as jnp
from jax.experimental import pallas as pl
from jax.experimental.pallas import tpu as pltpu


_LANE = 128                              # class axis padded to a multiple of this
_VMEM_LIMIT_BYTES = 48 * 1024 * 1024     # > 32 MiB default scoped, < v7x 64 MiB physical
_STREAM_BUDGET_BYTES = 40 * 1024 * 1024  # budget for double-buffered x/out streams


def _round_up(x, m):
    return ((x + m - 1) // m) * m


def _classifier_kernel(x_ref, wt_ref, b_ref, o_ref, *, n_classes, compute_dtype):
    # x_ref:  (TN, H)   streamed tile of input features
    # wt_ref: (H,  Cp)  full transposed weight, resident, compute_dtype (bf16)
    # b_ref:  (1,  Cp)  bias (f32), broadcast over rows
    # o_ref:  (TN, Cp)  log-softmax output tile (padded classes sliced off outside)
    x = x_ref[...].astype(compute_dtype)              # bf16 MXU operands
    logits = jnp.dot(x, wt_ref[...],
                     preferred_element_type=jnp.float32) + b_ref[...]
    cp = logits.shape[-1]
    if n_classes < cp:                                # mask padded (fake) classes
        col = jax.lax.broadcasted_iota(jnp.int32, logits.shape, 1)
        logits = jnp.where(col < n_classes, logits, -1e30)
    m = jnp.max(logits, axis=-1, keepdims=True)
    shifted = logits - m
    lse = jnp.log(jnp.sum(jnp.exp(shifted), axis=-1, keepdims=True))
    o_ref[...] = (shifted - lse).astype(o_ref.dtype)


def prepare_classifier_params(weight, bias, compute_dtype=jnp.bfloat16):
    """One-time parameter prep (do OUTSIDE the per-call hot path).

    weight: [C, H] (PyTorch nn.Linear layout), bias: [C].
    Returns W^T padded to [H, Cp] in `compute_dtype` and bias as [1, Cp] f32,
    Cp = round_up(C, 128) so the class/output axis is lane-dense on TPU.
    """
    C, H = weight.shape
    Cp = _round_up(C, _LANE)
    wt = jnp.zeros((H, Cp), compute_dtype).at[:, :C].set(weight.T.astype(compute_dtype))
    b = jnp.zeros((1, Cp), jnp.float32).at[:, :C].set(bias.astype(jnp.float32))
    return wt, b


def _pick_tile_n(N, H, Cp, x_itemsize, out_itemsize, resident_bytes):
    """Largest row tile whose double-buffered x/out streams fit the VMEM budget."""
    budget = max(_STREAM_BUDGET_BYTES - resident_bytes, 1 << 20)
    per_row = 2 * (H * x_itemsize + Cp * out_itemsize)   # 2x = double buffering
    tile = 16
    for cand in (512, 256, 128, 64, 32, 16):
        if cand * per_row <= budget:
            tile = cand
            break
    tile = min(tile, max(16, _round_up(N, 16)))
    # Keep a few grid steps so the "parallel" axis can spread across the two
    # TensorCores on v7x (don't collapse the grid to a single step).
    while tile >= 256 and pl.cdiv(N, tile) < 4:
        tile //= 2
    return max(tile, 16)


@functools.partial(jax.jit, static_argnames=("n_classes", "tile_n"))
def classifier_forward(features, wt_padded, bias_padded, *, n_classes, tile_n=None):
    """features: [N, H]; wt_padded: [H, Cp], bias_padded: [1, Cp] (from
    prepare_classifier_params).  Returns log_softmax(x @ W^T + b) of shape
    [N, n_classes] in the features dtype."""
    N, H = features.shape
    Hw, Cp = wt_padded.shape
    if Hw != H:
        raise ValueError(f"hidden-dim mismatch: features H={H}, weight H={Hw}")
    out_dtype = features.dtype
    if tile_n is None:
        resident = (wt_padded.size * jnp.dtype(wt_padded.dtype).itemsize
                    + bias_padded.size * jnp.dtype(bias_padded.dtype).itemsize)
        tile_n = _pick_tile_n(N, H, Cp,
                              jnp.dtype(features.dtype).itemsize,
                              jnp.dtype(out_dtype).itemsize,
                              resident)

    kernel = functools.partial(_classifier_kernel,
                               n_classes=n_classes,
                               compute_dtype=wt_padded.dtype)
    grid = (pl.cdiv(N, tile_n),)
    out_padded = pl.pallas_call(
        kernel,
        out_shape=jax.ShapeDtypeStruct((N, Cp), out_dtype),
        grid_spec=pltpu.PrefetchScalarGridSpec(
            num_scalar_prefetch=0,
            grid=grid,
            in_specs=[
                # streamed, double-buffered row tiles of x
                pl.BlockSpec((tile_n, H), lambda i: (i, 0)),
                # constant across the grid -> single-buffered residents
                pl.BlockSpec((H, Cp), lambda i: (0, 0),
                             pipeline_mode=pl.Buffered(1)),
                pl.BlockSpec((1, Cp), lambda i: (0, 0),
                             pipeline_mode=pl.Buffered(1)),
            ],
            out_specs=pl.BlockSpec((tile_n, Cp), lambda i: (i, 0)),
        ),
        compiler_params=pltpu.CompilerParams(
            dimension_semantics=("parallel",),
            vmem_limit_bytes=_VMEM_LIMIT_BYTES),
    )(features, wt_padded, bias_padded)
    # TODO(synk): for very large class counts (W^T no longer VMEM-resident) add a
    # class-tiled grid axis with a two-pass / online log-softmax.
    return out_padded[:, :n_classes]


def init_linear_params(key, n_hidden, n_classes, dtype=jnp.float32):
    """Deterministic init mirroring nn.Linear.reset_parameters:
    kaiming_uniform(a=sqrt(5)) on weight -> U(-1/sqrt(fan_in), 1/sqrt(fan_in)),
    bias -> U(-1/sqrt(fan_in), 1/sqrt(fan_in))."""
    kw, kb = jax.random.split(key)
    bound = 1.0 / math.sqrt(n_hidden)
    weight = jax.random.uniform(kw, (n_classes, n_hidden), dtype,
                                minval=-bound, maxval=bound)
    bias = jax.random.uniform(kb, (n_classes,), dtype,
                              minval=-bound, maxval=bound)
    return weight, bias


if __name__ == "__main__":
    key = jax.random.PRNGKey(0)
    k_feat, k_param = jax.random.split(key)

    N, n_hidden, n_classes = 512, 256, 16
    features = jax.random.normal(k_feat, (N, n_hidden), jnp.float32)
    weight, bias = init_linear_params(k_param, n_hidden, n_classes)

    # one-time parameter prep (transpose + lane-pad + bf16) outside the hot path
    wt_p, b_p = prepare_classifier_params(weight, bias)

    out = classifier_forward(features, wt_p, b_p, n_classes=n_classes)
    out = jax.block_until_ready(out)

    # reference check in plain JAX (f32); bf16 MXU operands -> looser tolerance
    ref = jax.nn.log_softmax(features @ weight.T + bias, axis=-1)
    assert out.shape == (N, n_classes)
    assert bool(jnp.all(jnp.isfinite(out)))
    assert jnp.allclose(out, ref, atol=3e-2, rtol=3e-2), (
        f"mismatch vs reference: max abs err "
        f"{float(jnp.max(jnp.abs(out - ref)))}")

    print("KERNEL_OK")
</pallas_src>

<mosaic_0001>
module attributes {stable_mosaic.version = 11 : i64} {
  func.func @_classifier_kernel(%arg0: i32, %arg1: memref<128x256xf32, #tpu.memory_space<vmem>>, %arg2: memref<256x128xbf16, #tpu.memory_space<vmem>>, %arg3: memref<1x128xf32, #tpu.memory_space<vmem>>, %arg4: memref<128x128xf32, #tpu.memory_space<vmem>>) attributes {dimension_semantics = [#tpu.dimension_semantics<parallel>], iteration_bounds = array<i64: 4>, scalar_prefetch = 0 : i64, scratch_operands = 0 : i64, tpu.core_type = #tpu.core_type<tc>, window_params = [{transform_indices = @transform_0, window_bounds = array<i64: 128, 256>}, {pipeline_mode = #tpu.pipeline_mode<synchronous>, transform_indices = @transform_1, window_bounds = array<i64: 256, 128>}, {pipeline_mode = #tpu.pipeline_mode<synchronous>, transform_indices = @transform_2, window_bounds = array<i64: 1, 128>}, {transform_indices = @transform_3, window_bounds = array<i64: 128, 128>}]} {
    %c0 = arith.constant 0 : index
    %c0_0 = arith.constant 0 : index
    %0 = vector.load %arg1[%c0, %c0_0] : memref<128x256xf32, #tpu.memory_space<vmem>>, vector<128x256xf32>
    %1 = arith.truncf %0 : vector<128x256xf32> to vector<128x256xbf16>
    %c0_1 = arith.constant 0 : index
    %c0_2 = arith.constant 0 : index
    %2 = vector.load %arg2[%c0_1, %c0_2] : memref<256x128xbf16, #tpu.memory_space<vmem>>, vector<256x128xbf16>
    %cst = arith.constant dense<0.000000e+00> : vector<128x128xf32>
    %3 = tpu.matmul %1, %2, %cst {dimension_numbers = #tpu.dot_dimension_numbers<[1], [0], [0], [1], [0, 0, 1, 1], [], []>} : vector<128x256xbf16>, vector<256x128xbf16>, vector<128x128xf32> -> vector<128x128xf32>
    %c0_3 = arith.constant 0 : index
    %c0_4 = arith.constant 0 : index
    %4 = vector.load %arg3[%c0_3, %c0_4] : memref<1x128xf32, #tpu.memory_space<vmem>>, vector<1x128xf32>
    %5 = vector.broadcast %4 : vector<1x128xf32> to vector<128x128xf32>
    %6 = arith.addf %3, %5 : vector<128x128xf32>
    %7 = tpu.iota {dimensions = array<i32: 1>} : vector<128x128xi32>
    %c16_i32 = arith.constant 16 : i32
    %8 = vector.broadcast %c16_i32 : i32 to vector<128x128xi32>
    %9 = arith.cmpi slt, %7, %8 : vector<128x128xi32>
    %cst_5 = arith.constant -1.000000e+30 : f32
    %10 = vector.broadcast %cst_5 : f32 to vector<128x128xf32>
    %11 = arith.select %9, %6, %10 : vector<128x128xi1>, vector<128x128xf32>
    %cst_6 = arith.constant dense<0xFF800000> : vector<128xf32>
    %12 = vector.multi_reduction <maximumf>, %11, %cst_6 [1] : vector<128x128xf32> to vector<128xf32>
    %13 = vector.shape_cast %12 : vector<128xf32> to vector<128x1xf32>
    %14 = vector.broadcast %13 : vector<128x1xf32> to vector<128x128xf32>
    %15 = arith.subf %11, %14 : vector<128x128xf32>
    %16 = math.exp %15 : vector<128x128xf32>
    %cst_7 = arith.constant dense<0.000000e+00> : vector<128xf32>
    %17 = vector.multi_reduction <add>, %16, %cst_7 [1] : vector<128x128xf32> to vector<128xf32>
    %18 = vector.shape_cast %17 : vector<128xf32> to vector<128x1xf32>
    %19 = math.log %18 : vector<128x1xf32>
    %20 = vector.broadcast %19 : vector<128x1xf32> to vector<128x128xf32>
    %21 = arith.subf %15, %20 : vector<128x128xf32>
    %c0_8 = arith.constant 0 : index
    %c0_9 = arith.constant 0 : index
    %22 = vector.load %arg4[%c0_8, %c0_9] : memref<128x128xf32, #tpu.memory_space<vmem>>, vector<128x128xf32>
    tpu.vector_store %arg4[%c0_8, %c0_9], %21 {strides = array<i32>} : memref<128x128xf32, #tpu.memory_space<vmem>>, vector<128x128xf32>,
    return
  }
  func.func @transform_0(%arg0: i32) -> (i32, i32) {
    %c0_i32 = arith.constant 0 : i32
    %c0_i32_0 = arith.constant 0 : i32
    return %arg0, %c0_i32 : i32, i32
  }
  func.func @transform_1(%arg0: i32) -> (i32, i32) {
    %c0_i32 = arith.constant 0 : i32
    %c0_i32_0 = arith.constant 0 : i32
    %c0_i32_1 = arith.constant 0 : i32
    return %c0_i32, %c0_i32_0 : i32, i32
  }
  func.func @transform_2(%arg0: i32) -> (i32, i32) {
    %c0_i32 = arith.constant 0 : i32
    %c0_i32_0 = arith.constant 0 : i32
    %c0_i32_1 = arith.constant 0 : i32
    return %c0_i32, %c0_i32_0 : i32, i32
  }
  func.func @transform_3(%arg0: i32) -> (i32, i32) {
    %c0_i32 = arith.constant 0 : i32
    %c0_i32_0 = arith.constant 0 : i32
    return %arg0, %c0_i32 : i32, i32
  }
}

</mosaic_0001>

<llo_original>
// kernel: classifier_forward.1
$region0: #{classifier_forward.1}
  #allocation0 [shape = 'u32[]', space=smem, size = 0x4, offset = 0x4, fixed_abs, tag = 'smem constant byte address 0x4 - core index']
  #allocation1 [shape = 'u32[144,128]{1,0:T(1,128)}', space=vmem, size = 0x12000, scoped, tag = 'internal scratch']
  %s0 = inlined_call_operand.hbm [shape: f32[512,256], index: 0, kind: input, shape index: {}]
  %s1 = inlined_call_operand.hbm [shape: bf16[256,128], index: 1, kind: input, shape index: {}]
  %s2 = inlined_call_operand.vmem [shape: f32[1,128], index: 2, kind: input, shape index: {}]
  %s3 = inlined_call_operand.vmem [shape: f32[512,128], index: 3, kind: output, shape index: {}]
  %s4 = sld [smem:[#allocation0]]
  $region53: #{classifier_forward.1} parent=0
    _
  %s6 = ssub.s32 1, %s4
  %s7 = scalar_select 0, %s6, %s4
  $region1: #{classifier_forward.1} parent=0
    #allocation2 [shape = 'u8[262144]{0}', space=vmem, size = 0x40000, scoped, tag = 'input window, operand 0']
    #allocation3 [shape = 's32[2]{0}', space=sflag, size = 0x8, scoped, tag = 'scoped memory for classifier_forward.1']
    #allocation4 [shape = 'u8[65536]{0}', space=vmem, size = 0x10000, scoped, tag = 'input window, operand 1, single buffered']
    #allocation5 [shape = 's32[1]{0}', space=sflag, size = 0x4, scoped, tag = 'scoped memory for classifier_forward.1']
    %8 = vsyncpa [#allocation3], 0
    %s9 = scalar_lea.sflag [#allocation3], 1
    %10 = vsyncpa %s9, 0
    %11 = vsyncpa [#allocation5], 0
    loop: start=0, step=1, limit=6
    $region2: #{classifier_forward.1} parent=1 // loop_pre_header
      _
    $region3: #{classifier_forward.1} parent=1 // loop_header
      %s13 = sphi 0, %s17
      %p14 = scmp.ge.s32.totalorder %s13, 6
      %s23 = sphi 0, %s25
      %s26 = sphi 0, %s23
      %s27 = sphi 0, %s26
      %s43 = sphi 0, %s27
      %s47 = sphi 0, %s47
      %s49 = sphi 0, %s47
      %s50 = sphi 0, %s49
      %s64 = sphi 0, %s50
      %s68 = sphi 0, %s68
      %s70 = sphi 0, %s68
      %s71 = sphi 0, %s70
      %s85 = sphi 0, %s71
      %s91 = sphi 0, %s93
      %s94 = sphi 0, %s91
      %s95 = sphi 0, %s94
      %s111 = sphi 0, %s95
    $region4: #{classifier_forward.1} parent=1 // loop_header_branch
      %16 = sbr.rel (%p14) target = $region8
    $region5: #{classifier_forward.1} parent=1 // loop_body
      %s18 = ssub.s32 %s13, 1
      %s19 = ssub.s32 %s13, 2
      %s20 = sadd.s32 %s13, 1
      %s21 = ssub.s32 %s13, %s20
      %p22 = scmp.eq.s32.totalorder %s21, 0
      %s24 = sadd.s32 %s23, 1
      %s25 = scalar_select %p22, %s23, %s24
      %p28 = pneg %p22
      %p29 = scmp.eq.s32.totalorder %s13, 3
      %p30 = por %p28, %p29
      %p31 = scmp.ne.s32.totalorder %s23, %s26
      %p32 = scmp.eq.s32.totalorder %s13, 0
      %p33 = por %p31, %p32
      %p34 = scmp.ne.s32.totalorder %s23, %s26
      %p35 = scmp.eq.s32.totalorder %s18, 3
      %p36 = por %p34, %p35
      %p37 = scmp.ne.s32.totalorder %s26, %s27
      %p38 = scmp.eq.s32.totalorder %s18, 0
      %p39 = por %p37, %p38
      %p40 = scmp.ne.s32.totalorder %s26, %s27
      %p41 = scmp.eq.s32.totalorder %s19, 3
      %p42 = por %p40, %p41
      %p44 = scmp.ne.s32.totalorder %s27, %s43
      %p45 = scmp.eq.s32.totalorder %s19, 0
      %p46 = por %p44, %p45
      %s48 = sadd.s32 %s47, 1
      %p51 = scmp.eq.s32.totalorder %s13, 3
      %p52 = scmp.ne.s32.totalorder %s47, %s49
      %p53 = scmp.eq.s32.totalorder %s13, 0
      %p54 = por %p52, %p53
      %p55 = scmp.ne.s32.totalorder %s47, %s49
      %p56 = scmp.eq.s32.totalorder %s18, 3
      %p57 = por %p55, %p56
      %p58 = scmp.ne.s32.totalorder %s49, %s50
      %p59 = scmp.eq.s32.totalorder %s18, 0
      %p60 = por %p58, %p59
      %p61 = scmp.ne.s32.totalorder %s49, %s50
      %p62 = scmp.eq.s32.totalorder %s19, 3
      %p63 = por %p61, %p62
      %p65 = scmp.ne.s32.totalorder %s50, %s64
      %p66 = scmp.eq.s32.totalorder %s19, 0
      %p67 = por %p65, %p66
      %s69 = sadd.s32 %s68, 1
      %p72 = scmp.eq.s32.totalorder %s13, 3
      %p73 = scmp.ne.s32.totalorder %s68, %s70
      %p74 = scmp.eq.s32.totalorder %s13, 0
      %p75 = por %p73, %p74
      %p76 = scmp.ne.s32.totalorder %s68, %s70
      %p77 = scmp.eq.s32.totalorder %s18, 3
      %p78 = por %p76, %p77
      %p79 = scmp.ne.s32.totalorder %s70, %s71
      %p80 = scmp.eq.s32.totalorder %s18, 0
      %p81 = por %p79, %p80
      %p82 = scmp.ne.s32.totalorder %s70, %s71
      %p83 = scmp.eq.s32.totalorder %s19, 3
      %p84 = por %p82, %p83
      %p86 = scmp.ne.s32.totalorder %s71, %s85
      %p87 = scmp.eq.s32.totalorder %s19, 0
      %p88 = por %p86, %p87
      %s89 = ssub.s32 %s13, %s20
      %p90 = scmp.eq.s32.totalorder %s89, 0
      %s92 = sadd.s32 %s91, 1
      %s93 = scalar_select %p90, %s91, %s92
      %p96 = pneg %p90
      %p97 = scmp.eq.s32.totalorder %s13, 3
      %p98 = por %p96, %p97
      %p99 = scmp.ne.s32.totalorder %s91, %s94
      %p100 = scmp.eq.s32.totalorder %s13, 0
      %p101 = por %p99, %p100
      %p102 = scmp.ne.s32.totalorder %s91, %s94
      %p103 = scmp.eq.s32.totalorder %s18, 3
      %p104 = por %p102, %p103
      %p105 = scmp.ne.s32.totalorder %s94, %s95
      %p106 = scmp.eq.s32.totalorder %s18, 0
      %p107 = por %p105, %p106
      %p108 = scmp.ne.s32.totalorder %s94, %s95
      %p109 = scmp.eq.s32.totalorder %s19, 3
      %p110 = por %p108, %p109
      %p112 = scmp.ne.s32.totalorder %s95, %s111
      %p113 = scmp.eq.s32.totalorder %s19, 0
      %p114 = por %p112, %p113
      %p115 = scmp.le.s32.totalorder 1, %s13
      %p116 = scmp.lt.s32.totalorder %s13, 5
      %p117 = pnand %p115, %p116
      %p118 = pneg %p117
      // Predicated region
      $region9: #{classifier_forward.1} parent=5 // pred_check
        _
      $region10: #{classifier_forward.1} parent=5 // pred_check_branch
        %120 = sbr.rel (%p117) target = $region12
      $region11: #{classifier_forward.1} parent=5 // pred_region
        %s121 = ssub.s32 %s13, 1
        // Predicated region
        $region13: #{classifier_forward.1} parent=11 // pred_check
          %p122 = pneg %p60
        $region14: #{classifier_forward.1} parent=11 // pred_check_branch
          %124 = sbr.rel (%p122) target = $region16
        $region15: #{classifier_forward.1} parent=11 // pred_region
          %s126 = ssub.s32 2048, 2048
          %127 = vsyncadd [#allocation5], %s126
          %s128 = sshll.u32 [#allocation4], 4
          %s129 = int_to_ptr.vmem [resolvable:$true] %s128
          %134 = dma.hbm_to_vmem [thread:$0]  %s1, 2048, %s129, [#allocation5], 64, 64, 4
        $region16: #{classifier_forward.1} parent=11 // pred_fallthru
          _
        // Predicated region
        $region17: #{classifier_forward.1} parent=11 // pred_check
          %p135 = pneg %p81
        $region18: #{classifier_forward.1} parent=11 // pred_check_branch
          %137 = sbr.rel (%p135) target = $region20
        $region19: #{classifier_forward.1} parent=11 // pred_region
          _
        $region20: #{classifier_forward.1} parent=11 // pred_fallthru
          _
      $region12: #{classifier_forward.1} parent=5 // pred_fallthru
        _
      %p138 = scmp.lt.s32.totalorder %s13, 4
      // Predicated region
      $region21: #{classifier_forward.1} parent=5 // pred_check
        %p139 = pneg %p138
      $region22: #{classifier_forward.1} parent=5 // pred_check_branch
        %141 = sbr.rel (%p139) target = $region24
      $region23: #{classifier_forward.1} parent=5 // pred_region
        // Predicated region
        $region25: #{classifier_forward.1} parent=23 // pred_check
          %p142 = pneg %p33
        $region26: #{classifier_forward.1} parent=23 // pred_check_branch
          %144 = sbr.rel (%p142) target = $region28
        $region27: #{classifier_forward.1} parent=23 // pred_region
          %s145 = sand.u32 %s23, 1
          %s146 = scalar_lea.sflag [#allocation3], %s145
          %s147 = sand.u32 %s23, 1
          %s148 = smul.addr %s147, 256
          %s149 = scalar_lea.vmem [#allocation2], %s148
          %s150 = smul.u32 16, %s13
          %s152 = ssub.s32 4096, 4096
          %153 = vsyncadd %s146, %s152
          %s154 = smul.addr %s150, 2
          %s155 = smul.addr %s154, 128
          %s156 = scalar_lea.hbm %s0, %s155
          %s157 = sshll.u32 %s149, 4
          %s158 = int_to_ptr.vmem [resolvable:$true] %s157
          %163 = dma.hbm_to_vmem [thread:$0]  %s156, 4096, %s158, %s146, 256, 256, 16
        $region28: #{classifier_forward.1} parent=23 // pred_fallthru
          _
      $region24: #{classifier_forward.1} parent=5 // pred_fallthru
        _
      %p164 = scmp.le.s32.totalorder 1, %s13
      %p165 = scmp.lt.s32.totalorder %s13, 5
      %p166 = pnand %p164, %p165
      %p167 = pneg %p166
      // Predicated region
      $region29: #{classifier_forward.1} parent=5 // pred_check
        _
      $region30: #{classifier_forward.1} parent=5 // pred_check_branch
        %169 = sbr.rel (%p166) target = $region32
      $region31: #{classifier_forward.1} parent=5 // pred_region
        %s170 = ssub.s32 %s13, 1
        %s171 = sand.u32 %s26, 1
        %s172 = scalar_lea.sflag [#allocation3], %s171
        %s173 = sand.u32 %s26, 1
        %s174 = smul.addr %s173, 256
        %s175 = scalar_lea.vmem [#allocation2], %s174
        // Predicated region
        $region33: #{classifier_forward.1} parent=31 // pred_check
          %p176 = pneg %p39
        $region34: #{classifier_forward.1} parent=31 // pred_check_branch
          %178 = sbr.rel (%p176) target = $region36
        $region35: #{classifier_forward.1} parent=31 // pred_region
          %179 = dma.done %s172, 4096
        $region36: #{classifier_forward.1} parent=31 // pred_fallthru
          _
        // Predicated region
        $region37: #{classifier_forward.1} parent=31 // pred_check
          %p180 = pneg %p60
        $region38: #{classifier_forward.1} parent=31 // pred_check_branch
          %182 = sbr.rel (%p180) target = $region40
        $region39: #{classifier_forward.1} parent=31 // pred_region
          %183 = dma.done [#allocation5], 2048
        $region40: #{classifier_forward.1} parent=31 // pred_fallthru
          _
        %s184 = sand.u32 %s26, 1
        %s185 = scalar_lea.sflag [#allocation3], %s184
        %s186 = sand.u32 %s26, 1
        %s187 = smul.addr %s186, 256
        %s188 = scalar_lea.vmem [#allocation2], %s187
        %p189 = pneg %p39
        %p190 = pneg %p36
        %p191 = pneg %p60
        %p192 = pneg %p57
        %p193 = pneg %p81
        %p194 = pneg %p78
        %p195 = pneg %p107
        %p196 = pneg %p104
        %s197 = smul.u32 16, %s18
        %p198 = scmp.lt.s32.totalorder %s197, 63
        %s199 = scalar_select %p198, %s197, 63
        %s200 = smul.addr %s199, 8
        %s201 = scalar_lea.vmem %s3, %s200
        %s202 = smul.u32 16, %s18
        %s203 = smul.u32 16, %s18
        %p204 = scmp.lt.s32.totalorder %s203, 63
        %s205 = scalar_select %p204, %s203, 63
        %s206 = smul.addr %s205, 8
        %s207 = scalar_lea.vmem %s3, %s206
        %s208 = smul.u32 16, %s18
        %v210 = vld [vmem:[%s175] sm:$0xff]
        %v211 = vld [vmem:[%s175 + $0x8] sm:$0xff]
        %v212 = vld [vmem:[%s175 + $0x10] sm:$0xff]
        %v213 = vld [vmem:[%s175 + $0x18] sm:$0xff]
        %v214 = vld [vmem:[%s175 + $0x20] sm:$0xff]
        %v215 = vld [vmem:[%s175 + $0x28] sm:$0xff]
        %v216 = vld [vmem:[%s175 + $0x30] sm:$0xff]
        %v217 = vld [vmem:[%s175 + $0x38] sm:$0xff]
        %v218 = vld [vmem:[%s175 + $0x40] sm:$0xff]
        %v219 = vld [vmem:[%s175 + $0x48] sm:$0xff]
        %v220 = vld [vmem:[%s175 + $0x50] sm:$0xff]
        %v221 = vld [vmem:[%s175 + $0x58] sm:$0xff]
        %v222 = vld [vmem:[%s175 + $0x60] sm:$0xff]
        %v223 = vld [vmem:[%s175 + $0x68] sm:$0xff]
        %v224 = vld [vmem:[%s175 + $0x70] sm:$0xff]
        %v225 = vld [vmem:[%s175 + $0x78] sm:$0xff]
        %v226 = vld [vmem:[%s175 + $0x80] sm:$0xff]
        %v227 = vld [vmem:[%s175 + $0x88] sm:$0xff]
        %v228 = vld [vmem:[%s175 + $0x90] sm:$0xff]
        %v229 = vld [vmem:[%s175 + $0x98] sm:$0xff]
        %v230 = vld [vmem:[%s175 + $0xa0] sm:$0xff]
        %v231 = vld [vmem:[%s175 + $0xa8] sm:$0xff]
        %v232 = vld [vmem:[%s175 + $0xb0] sm:$0xff]
        %v233 = vld [vmem:[%s175 + $0xb8] sm:$0xff]
        %v234 = vld [vmem:[%s175 + $0xc0] sm:$0xff]
        %v235 = vld [vmem:[%s175 + $0xc8] sm:$0xff]
        %v236 = vld [vmem:[%s175 + $0xd0] sm:$0xff]
        %v237 = vld [vmem:[%s175 + $0xd8] sm:$0xff]
        %v238 = vld [vmem:[%s175 + $0xe0] sm:$0xff]
        %v239 = vld [vmem:[%s175 + $0xe8] sm:$0xff]
        %v240 = vld [vmem:[%s175 + $0xf0] sm:$0xff]
        %v241 = vld [vmem:[%s175 + $0xf8] sm:$0xff]
        %v242 = vpack.c.bf16 %v212, %v210
        %v243 = vpack.c.bf16 %v213, %v211
        %v244 = vpack.c.bf16 %v216, %v214
        %v245 = vpack.c.bf16 %v217, %v215
        %v246 = vpack.c.bf16 %v220, %v218
        %v247 = vpack.c.bf16 %v221, %v219
        %v248 = vpack.c.bf16 %v224, %v222
        %v249 = vpack.c.bf16 %v225, %v223
        %v250 = vpack.c.bf16 %v228, %v226
        %v251 = vpack.c.bf16 %v229, %v227
        %v252 = vpack.c.bf16 %v232, %v230
        %v253 = vpack.c.bf16 %v233, %v231
        %v254 = vpack.c.bf16 %v236, %v234
        %v255 = vpack.c.bf16 %v237, %v235
        %v256 = vpack.c.bf16 %v240, %v238
        %v257 = vpack.c.bf16 %v241, %v239
        %v258 = vld [vmem:[#allocation4] sm:$0xf]
        %v259 = vld [vmem:[#allocation4 + $0x4] sm:$0xf]
        %v260 = vld [vmem:[#allocation4 + $0x8] sm:$0xf]
        %v261 = vld [vmem:[#allocation4 + $0xc] sm:$0xf]
        %v262 = vld [vmem:[#allocation4 + $0x10] sm:$0xf]
        %v263 = vld [vmem:[#allocation4 + $0x14] sm:$0xf]
        %v264 = vld [vmem:[#allocation4 + $0x18] sm:$0xf]
        %v265 = vld [vmem:[#allocation4 + $0x1c] sm:$0xf]
        %v266 = vld [vmem:[#allocation4 + $0x20] sm:$0xf]
        %v267 = vld [vmem:[#allocation4 + $0x24] sm:$0xf]
        %v268 = vld [vmem:[#allocation4 + $0x28] sm:$0xf]
        %v269 = vld [vmem:[#allocation4 + $0x2c] sm:$0xf]
        %v270 = vld [vmem:[#allocation4 + $0x30] sm:$0xf]
        %v271 = vld [vmem:[#allocation4 + $0x34] sm:$0xf]
        %v272 = vld [vmem:[#allocation4 + $0x38] sm:$0xf]
        %v273 = vld [vmem:[#allocation4 + $0x3c] sm:$0xf]
        %v274 = vld [vmem:[#allocation4 + $0x40] sm:$0xf]
        %v275 = vld [vmem:[#allocation4 + $0x44] sm:$0xf]
        %v276 = vld [vmem:[#allocation4 + $0x48] sm:$0xf]
        %v277 = vld [vmem:[#allocation4 + $0x4c] sm:$0xf]
        %v278 = vld [vmem:[#allocation4 + $0x50] sm:$0xf]
        %v279 = vld [vmem:[#allocation4 + $0x54] sm:$0xf]
        %v280 = vld [vmem:[#allocation4 + $0x58] sm:$0xf]
        %v281 = vld [vmem:[#allocation4 + $0x5c] sm:$0xf]
        %v282 = vld [vmem:[#allocation4 + $0x60] sm:$0xf]
        %v283 = vld [vmem:[#allocation4 + $0x64] sm:$0xf]
        %v284 = vld [vmem:[#allocation4 + $0x68] sm:$0xf]
        %v285 = vld [vmem:[#allocation4 + $0x6c] sm:$0xf]
        %v286 = vld [vmem:[#allocation4 + $0x70] sm:$0xf]
        %v287 = vld [vmem:[#allocation4 + $0x74] sm:$0xf]
        %v288 = vld [vmem:[#allocation4 + $0x78] sm:$0xf]
        %v289 = vld [vmem:[#allocation4 + $0x7c] sm:$0xf]
        %v290 = vld [vmem:[%s2] sm:$0x1]
        %v292 = vlaneseq
        %v293 = vshrl.u32 %v292, 7
        %v294 = vsub.s32 0, %v293
        %v295 = vrot.slane %v290, %v294
        %v329 = vunpack.c.l.b16 %v258
        %v330 = vunpack.c.l.b16 %v259
        %v331 = vunpack.c.l.b16 %v260
        %v332 = vunpack.c.l.b16 %v261
        %v333 = vunpack.c.l.b16 %v262
        %v334 = vunpack.c.l.b16 %v263
        %v335 = vunpack.c.l.b16 %v264
        %v336 = vunpack.c.l.b16 %v265
        %v337 = vunpack.c.l.b16 %v266
        %v338 = vunpack.c.l.b16 %v267
        %v339 = vunpack.c.l.b16 %v268
        %v340 = vunpack.c.l.b16 %v269
        %v341 = vunpack.c.l.b16 %v270
        %v342 = vunpack.c.l.b16 %v271
        %v343 = vunpack.c.l.b16 %v272
        %v344 = vunpack.c.l.b16 %v273
        %v345 = vunpack.c.l.b16 %v274
        %v346 = vunpack.c.l.b16 %v275
        %v347 = vunpack.c.l.b16 %v276
        %v348 = vunpack.c.l.b16 %v277
        %v349 = vunpack.c.l.b16 %v278
        %v350 = vunpack.c.l.b16 %v279
        %v351 = vunpack.c.l.b16 %v280
        %v352 = vunpack.c.l.b16 %v281
        %v353 = vunpack.c.l.b16 %v282
        %v354 = vunpack.c.l.b16 %v283
        %v355 = vunpack.c.l.b16 %v284
        %v356 = vunpack.c.l.b16 %v285
        %v357 = vunpack.c.l.b16 %v286
        %v358 = vunpack.c.l.b16 %v287
        %v359 = vunpack.c.l.b16 %v288
        %v360 = vunpack.c.l.b16 %v289
        %v361 = vpack.c.b16 %v330, %v329
        %v362 = vpack.c.b16 %v332, %v331
        %v363 = vpack.c.b16 %v334, %v333
        %v364 = vpack.c.b16 %v336, %v335
        %v365 = vpack.c.b16 %v338, %v337
        %v366 = vpack.c.b16 %v340, %v339
        %v367 = vpack.c.b16 %v342, %v341
        %v368 = vpack.c.b16 %v344, %v343
        %v369 = vpack.c.b16 %v346, %v345
        %v370 = vpack.c.b16 %v348, %v347
        %v371 = vpack.c.b16 %v350, %v349
        %v372 = vpack.c.b16 %v352, %v351
        %v373 = vpack.c.b16 %v354, %v353
        %v374 = vpack.c.b16 %v356, %v355
        %v375 = vpack.c.b16 %v358, %v357
        %v376 = vpack.c.b16 %v360, %v359
        %393 = vmatprep.subr.bf16.mxu0 0
        %394 = vmatpush1.bf16.msra.mxu0 %v361
        %395 = vmatprep.subr.bf16.mxu0 0
        %396 = vmatpush1.bf16.msra.mxu0 %v362
        %397 = vmatprep.subr.bf16.mxu0 0
        %398 = vmatpush1.bf16.msra.mxu0 %v363
        %399 = vmatprep.subr.bf16.mxu0 0
        %400 = vmatpush1.bf16.msra.mxu0 %v364
        %401 = vmatprep.subr.bf16.mxu0 0
        %402 = vmatpush1.bf16.msra.mxu0 %v365
        %403 = vmatprep.subr.bf16.mxu0 0
        %404 = vmatpush1.bf16.msra.mxu0 %v366
        %405 = vmatprep.subr.bf16.mxu0 0
        %406 = vmatpush1.bf16.msra.mxu0 %v367
        %407 = vmatprep.subr.bf16.mxu0 0
        %408 = vmatpush1.bf16.msra.mxu0 %v368
        %409 = vmatprep.subr.bf16.mxu0 0
        %410 = vmatpush1.bf16.msra.mxu0 %v369
        %411 = vmatprep.subr.bf16.mxu0 0
        %412 = vmatpush1.bf16.msra.mxu0 %v370
        %413 = vmatprep.subr.bf16.mxu0 0
        %414 = vmatpush1.bf16.msra.mxu0 %v371
        %415 = vmatprep.subr.bf16.mxu0 0
        %416 = vmatpush1.bf16.msra.mxu0 %v372
        %417 = vmatprep.subr.bf16.mxu0 0
        %418 = vmatpush1.bf16.msra.mxu0 %v373
        %419 = vmatprep.subr.bf16.mxu0 0
        %420 = vmatpush1.bf16.msra.mxu0 %v374
        %421 = vmatprep.subr.bf16.mxu0 0
        %422 = vmatpush1.bf16.msra.mxu0 %v375
        %423 = vmatprep.subr.bf16.mxu0 0
        %424 = vmatpush1.bf16.msra.mxu0 %v376
        %425 = vmatprep.mubr.bf16.mxu0 %v243
        %426 = vmatmul.mubr.bf16.gmra.mrb[0].mxu0 %v242
        %v427 = vpop.f32.mrb[0].mxu0
        %v428 = vadd.f32 %v295, %v427
        %v429 = vpop.f32.mrb[0].mxu0
        %v430 = vpop.f32.mrb[0].mxu0
        %v431 = vadd.f32 %v295, %v430
        %v432 = vpop.f32.mrb[0].mxu0
        %433 = vmatprep.mubr.bf16.mxu0 %v245
        %434 = vmatmul.mubr.bf16.gmra.mrb[0].mxu0 %v244
        %v435 = vpop.f32.mrb[0].mxu0
        %v436 = vadd.f32 %v295, %v435
        %v437 = vpop.f32.mrb[0].mxu0
        %v438 = vpop.f32.mrb[0].mxu0
        %v439 = vadd.f32 %v295, %v438
        %v440 = vpop.f32.mrb[0].mxu0
        %441 = vmatprep.mubr.bf16.mxu0 %v247
        %442 = vmatmul.mubr.bf16.gmra.mrb[0].mxu0 %v246
        %v443 = vpop.f32.mrb[0].mxu0
        %v444 = vadd.f32 %v295, %v443
        %v445 = vpop.f32.mrb[0].mxu0
        %v446 = vpop.f32.mrb[0].mxu0
        %v447 = vadd.f32 %v295, %v446
        %v448 = vpop.f32.mrb[0].mxu0
        %449 = vmatprep.mubr.bf16.mxu0 %v249
        %450 = vmatmul.mubr.bf16.gmra.mrb[0].mxu0 %v248
        %v451 = vpop.f32.mrb[0].mxu0
        %v452 = vadd.f32 %v295, %v451
        %v453 = vpop.f32.mrb[0].mxu0
        %v454 = vpop.f32.mrb[0].mxu0
        %v455 = vadd.f32 %v295, %v454
        %v456 = vpop.f32.mrb[0].mxu0
        %457 = vmatprep.mubr.bf16.mxu0 %v251
        %458 = vmatmul.mubr.bf16.gmra.mrb[0].mxu0 %v250
        %v459 = vpop.f32.mrb[0].mxu0
        %v460 = vadd.f32 %v295, %v459
        %v461 = vpop.f32.mrb[0].mxu0
        %v462 = vpop.f32.mrb[0].mxu0
        %v463 = vadd.f32 %v295, %v462
        %v464 = vpop.f32.mrb[0].mxu0
        %465 = vmatprep.mubr.bf16.mxu0 %v253
        %466 = vmatmul.mubr.bf16.gmra.mrb[0].mxu0 %v252
        %v467 = vpop.f32.mrb[0].mxu0
        %v468 = vadd.f32 %v295, %v467
        %v469 = vpop.f32.mrb[0].mxu0
        %v470 = vpop.f32.mrb[0].mxu0
        %v471 = vadd.f32 %v295, %v470
        %v472 = vpop.f32.mrb[0].mxu0
        %473 = vmatprep.mubr.bf16.mxu0 %v255
        %474 = vmatmul.mubr.bf16.gmra.mrb[0].mxu0 %v254
        %v475 = vpop.f32.mrb[0].mxu0
        %v476 = vadd.f32 %v295, %v475
        %v477 = vpop.f32.mrb[0].mxu0
        %v478 = vpop.f32.mrb[0].mxu0
        %v479 = vadd.f32 %v295, %v478
        %v480 = vpop.f32.mrb[0].mxu0
        %481 = vmatprep.mubr.bf16.mxu0 %v257
        %482 = vmatmul.mubr.bf16.gmra.mrb[0].mxu0 %v256
        %v483 = vpop.f32.mrb[0].mxu0
        %v484 = vadd.f32 %v295, %v483
        %v485 = vpop.f32.mrb[0].mxu0
        %v486 = vpop.f32.mrb[0].mxu0
        %v487 = vadd.f32 %v295, %v486
        %v488 = vpop.f32.mrb[0].mxu0
        %489 = vdwg.mxu0
        %v490 = vlaneseq
        %v491 = vand.u32 %v490, 127
        %vm492 = vcmp.lt.s32.totalorder %v491, 16
        %v493 = vsel %vm492, %v428, -1e+30
        %v494 = vsel %vm492, %v431, -1e+30
        %v495 = vsel %vm492, %v436, -1e+30
        %v496 = vsel %vm492, %v439, -1e+30
        %v497 = vsel %vm492, %v444, -1e+30
        %v498 = vsel %vm492, %v447, -1e+30
        %v499 = vsel %vm492, %v452, -1e+30
        %v500 = vsel %vm492, %v455, -1e+30
        %v501 = vsel %vm492, %v460, -1e+30
        %v502 = vsel %vm492, %v463, -1e+30
        %v503 = vsel %vm492, %v468, -1e+30
        %v504 = vsel %vm492, %v471, -1e+30
        %v505 = vsel %vm492, %v476, -1e+30
        %v506 = vsel %vm492, %v479, -1e+30
        %v507 = vsel %vm492, %v484, -1e+30
        %v508 = vsel %vm492, %v487, -1e+30
        %509 = vmax.xlane.f32.xlu0 %v493
        %v510 = vpop.xlane.xlu0 %509
        %511 = vmax.xlane.f32.xlu0 %v494
        %v512 = vpop.xlane.xlu0 %511
        %513 = vmax.xlane.f32.xlu0 %v495
        %v514 = vpop.xlane.xlu0 %513
        %515 = vmax.xlane.f32.xlu0 %v496
        %v516 = vpop.xlane.xlu0 %515
        %517 = vmax.xlane.f32.xlu0 %v497
        %v518 = vpop.xlane.xlu0 %517
        %519 = vmax.xlane.f32.xlu0 %v498
        %v520 = vpop.xlane.xlu0 %519
        %521 = vmax.xlane.f32.xlu0 %v499
        %v522 = vpop.xlane.xlu0 %521
        %523 = vmax.xlane.f32.xlu0 %v500
        %v524 = vpop.xlane.xlu0 %523
        %525 = vmax.xlane.f32.xlu0 %v501
        %v526 = vpop.xlane.xlu0 %525
        %527 = vmax.xlane.f32.xlu0 %v502
        %v528 = vpop.xlane.xlu0 %527
        %529 = vmax.xlane.f32.xlu0 %v503
        %v530 = vpop.xlane.xlu0 %529
        %531 = vmax.xlane.f32.xlu0 %v504
        %v532 = vpop.xlane.xlu0 %531
        %533 = vmax.xlane.f32.xlu0 %v505
        %v534 = vpop.xlane.xlu0 %533
        %535 = vmax.xlane.f32.xlu0 %v506
        %v536 = vpop.xlane.xlu0 %535
        %537 = vmax.xlane.f32.xlu0 %v507
        %v538 = vpop.xlane.xlu0 %537
        %539 = vmax.xlane.f32.xlu0 %v508
        %v540 = vpop.xlane.xlu0 %539
        %v541 = vsub.f32 %v493, %v510
        %v542 = vsub.f32 %v494, %v512
        %v543 = vsub.f32 %v495, %v514
        %v544 = vsub.f32 %v496, %v516
        %v545 = vsub.f32 %v497, %v518
        %v546 = vsub.f32 %v498, %v520
        %v547 = vsub.f32 %v499, %v522
        %v548 = vsub.f32 %v500, %v524
        %v549 = vsub.f32 %v501, %v526
        %v550 = vsub.f32 %v502, %v528
        %v551 = vsub.f32 %v503, %v530
        %v552 = vsub.f32 %v504, %v532
        %v553 = vsub.f32 %v505, %v534
        %v554 = vsub.f32 %v506, %v536
        %v555 = vsub.f32 %v507, %v538
        %v556 = vsub.f32 %v508, %v540
        %v557 = vmul.f32 %v541, 1.442695
        %v558 = vpow.pop %v557
        %v559 = vmul.f32 %v542, 1.442695
        %v560 = vpow.pop %v559
        %v561 = vmul.f32 %v543, 1.442695
        %v562 = vpow.pop %v561
        %v563 = vmul.f32 %v544, 1.442695
        %v564 = vpow.pop %v563
        %v565 = vmul.f32 %v545, 1.442695
        %v566 = vpow.pop %v565
        %v567 = vmul.f32 %v546, 1.442695
        %v568 = vpow.pop %v567
        %v569 = vmul.f32 %v547, 1.442695
        %v570 = vpow.pop %v569
        %v571 = vmul.f32 %v548, 1.442695
        %v572 = vpow.pop %v571
        %v573 = vmul.f32 %v549, 1.442695
        %v574 = vpow.pop %v573
        %v575 = vmul.f32 %v550, 1.442695
        %v576 = vpow.pop %v575
        %v577 = vmul.f32 %v551, 1.442695
        %v578 = vpow.pop %v577
        %v579 = vmul.f32 %v552, 1.442695
        %v580 = vpow.pop %v579
        %v581 = vmul.f32 %v553, 1.442695
        %v582 = vpow.pop %v581
        %v583 = vmul.f32 %v554, 1.442695
        %v584 = vpow.pop %v583
        %v585 = vmul.f32 %v555, 1.442695
        %v586 = vpow.pop %v585
        %v587 = vmul.f32 %v556, 1.442695
        %v588 = vpow.pop %v587
        %589 = vadd.xlane.f32.xlu0 %v558
        %v590 = vpop.xlane.xlu0 %589
        %591 = vadd.xlane.f32.xlu0 %v560
        %v592 = vpop.xlane.xlu0 %591
        %593 = vadd.xlane.f32.xlu0 %v562
        %v594 = vpop.xlane.xlu0 %593
        %595 = vadd.xlane.f32.xlu0 %v564
        %v596 = vpop.xlane.xlu0 %595
        %597 = vadd.xlane.f32.xlu0 %v566
        %v598 = vpop.xlane.xlu0 %597
        %599 = vadd.xlane.f32.xlu0 %v568
        %v600 = vpop.xlane.xlu0 %599
        %601 = vadd.xlane.f32.xlu0 %v570
        %v602 = vpop.xlane.xlu0 %601
        %603 = vadd.xlane.f32.xlu0 %v572
        %v604 = vpop.xlane.xlu0 %603
        %605 = vadd.xlane.f32.xlu0 %v574
        %v606 = vpop.xlane.xlu0 %605
        %607 = vadd.xlane.f32.xlu0 %v576
        %v608 = vpop.xlane.xlu0 %607
        %609 = vadd.xlane.f32.xlu0 %v578
        %v610 = vpop.xlane.xlu0 %609
        %611 = vadd.xlane.f32.xlu0 %v580
        %v612 = vpop.xlane.xlu0 %611
        %613 = vadd.xlane.f32.xlu0 %v582
        %v614 = vpop.xlane.xlu0 %613
        %615 = vadd.xlane.f32.xlu0 %v584
        %v616 = vpop.xlane.xlu0 %615
        %617 = vadd.xlane.f32.xlu0 %v586
        %v618 = vpop.xlane.xlu0 %617
        %619 = vadd.xlane.f32.xlu0 %v588
        %v620 = vpop.xlane.xlu0 %619
        %v621 = vlog2.pop %v590
        %v622 = vmul.f32 %v621, 0.6931472
        %v623 = vlog2.pop %v592
        %v624 = vmul.f32 %v623, 0.6931472
        %v625 = vlog2.pop %v594
        %v626 = vmul.f32 %v625, 0.6931472
        %v627 = vlog2.pop %v596
        %v628 = vmul.f32 %v627, 0.6931472
        %v629 = vlog2.pop %v598
        %v630 = vmul.f32 %v629, 0.6931472
        %v631 = vlog2.pop %v600
        %v632 = vmul.f32 %v631, 0.6931472
        %v633 = vlog2.pop %v602
        %v634 = vmul.f32 %v633, 0.6931472
        %v635 = vlog2.pop %v604
        %v636 = vmul.f32 %v635, 0.6931472
        %v637 = vlog2.pop %v606
        %v638 = vmul.f32 %v637, 0.6931472
        %v639 = vlog2.pop %v608
        %v640 = vmul.f32 %v639, 0.6931472
        %v641 = vlog2.pop %v610
        %v642 = vmul.f32 %v641, 0.6931472
        %v643 = vlog2.pop %v612
        %v644 = vmul.f32 %v643, 0.6931472
        %v645 = vlog2.pop %v614
        %v646 = vmul.f32 %v645, 0.6931472
        %v647 = vlog2.pop %v616
        %v648 = vmul.f32 %v647, 0.6931472
        %v649 = vlog2.pop %v618
        %v650 = vmul.f32 %v649, 0.6931472
        %v651 = vlog2.pop %v620
        %v652 = vmul.f32 %v651, 0.6931472
        %v653 = vsub.f32 %v541, %v622
        %v654 = vsub.f32 %v542, %v624
        %v655 = vsub.f32 %v543, %v626
        %v656 = vsub.f32 %v544, %v628
        %v657 = vsub.f32 %v545, %v630
        %v658 = vsub.f32 %v546, %v632
        %v659 = vsub.f32 %v547, %v634
        %v660 = vsub.f32 %v548, %v636
        %v661 = vsub.f32 %v549, %v638
        %v662 = vsub.f32 %v550, %v640
        %v663 = vsub.f32 %v551, %v642
        %v664 = vsub.f32 %v552, %v644
        %v665 = vsub.f32 %v553, %v646
        %v666 = vsub.f32 %v554, %v648
        %v667 = vsub.f32 %v555, %v650
        %v668 = vsub.f32 %v556, %v652
        %669 = vst [vmem:[%s207] sm:$0xff] %v653
        %670 = vst [vmem:[%s207 + $0x8] sm:$0xff] %v654
        %671 = vst [vmem:[%s207 + $0x10] sm:$0xff] %v655
        %672 = vst [vmem:[%s207 + $0x18] sm:$0xff] %v656
        %673 = vst [vmem:[%s207 + $0x20] sm:$0xff] %v657
        %674 = vst [vmem:[%s207 + $0x28] sm:$0xff] %v658
        %675 = vst [vmem:[%s207 + $0x30] sm:$0xff] %v659
        %676 = vst [vmem:[%s207 + $0x38] sm:$0xff] %v660
        %677 = vst [vmem:[%s207 + $0x40] sm:$0xff] %v661
        %678 = vst [vmem:[%s207 + $0x48] sm:$0xff] %v662
        %679 = vst [vmem:[%s207 + $0x50] sm:$0xff] %v663
        %680 = vst [vmem:[%s207 + $0x58] sm:$0xff] %v664
        %681 = vst [vmem:[%s207 + $0x60] sm:$0xff] %v665
        %682 = vst [vmem:[%s207 + $0x68] sm:$0xff] %v666
        %683 = vst [vmem:[%s207 + $0x70] sm:$0xff] %v667
        %684 = vst [vmem:[%s207 + $0x78] sm:$0xff] %v668
        %s685 = smul.u32 16, %s18
        %p686 = scmp.lt.s32.totalorder %s685, 63
        %s687 = scalar_select %p686, %s685, 63
        %s688 = smul.addr %s687, 8
        %s689 = scalar_lea.vmem %s3, %s688
        // Predicated region
        $region41: #{classifier_forward.1} parent=31 // pred_check
          %p690 = pneg %p104
        $region42: #{classifier_forward.1} parent=31 // pred_check_branch
          %692 = sbr.rel (%p690) target = $region44
        $region43: #{classifier_forward.1} parent=31 // pred_region
          %s693 = smul.u32 16, %s18
        $region44: #{classifier_forward.1} parent=31 // pred_fallthru
          _
      $region32: #{classifier_forward.1} parent=5 // pred_fallthru
        _
      %p694 = scmp.le.s32.totalorder 2, %s13
      // Predicated region
      $region45: #{classifier_forward.1} parent=5 // pred_check
        %p695 = pneg %p694
      $region46: #{classifier_forward.1} parent=5 // pred_check_branch
        %697 = sbr.rel (%p695) target = $region48
      $region47: #{classifier_forward.1} parent=5 // pred_region
        %s698 = ssub.s32 %s13, 2
        // Predicated region
        $region49: #{classifier_forward.1} parent=47 // pred_check
          %p699 = pneg %p110
        $region50: #{classifier_forward.1} parent=47 // pred_check_branch
          %701 = sbr.rel (%p699) target = $region52
        $region51: #{classifier_forward.1} parent=47 // pred_region
          %s702 = smul.u32 16, %s19
          %p703 = scmp.lt.s32.totalorder %s702, 63
          %s704 = scalar_select %p703, %s702, 63
          %s705 = smul.addr %s704, 8
          %s706 = scalar_lea.vmem %s3, %s705
        $region52: #{classifier_forward.1} parent=47 // pred_fallthru
          _
      $region48: #{classifier_forward.1} parent=5 // pred_fallthru
        _
    $region6: #{classifier_forward.1} parent=1 // loop_footer
      %s17 = sadd.s32 1, %s13
    $region7: #{classifier_forward.1} parent=1 // loop_footer_branch
      %12 = sbr.rel target = $region3
    $region8: #{classifier_forward.1} parent=1 // loop_exit
      _
    %707 = vsyncpa [#allocation3], 1
    %s708 = scalar_lea.sflag [#allocation3], 1
    %709 = vsyncpa %s708, 1
    %710 = vsyncpa [#allocation5], 1

</llo_original>
